<compile_context>
chip_gen: v7x
topology: tpu7x:2x2x1
jax: 0.10.0
libtpu: 0.0.40
codegen_flags: <defaults>
</compile_context>

<pallas_src>
import functools
import math

import jax
import jax.numpy as jnp
from jax.experimental import pallas as pl
from jax.experimental.pallas import tpu as pltpu

BN_EPS = 1e-3


def _round_up(a, b):
    return (a + b - 1) // b * b


def _get_vmem_capacity():
    try:
        return int(pltpu.get_tpu_info().vmem_capacity_bytes)
    except Exception:
        return 64 << 20  # v7x-safe fallback


def _vmem_limit(need_bytes, vmem_cap):
    need = need_bytes + (8 << 20)                       # pipelining / scratch headroom
    return int(min(max(need, 32 << 20), vmem_cap - (8 << 20)))


def _pick_tiles(n, c, hw, x_isz, y_isz, w1_bytes, hid_pad, vmem_cap):
    """Per-generation batch tiles for kernel 1 (conv+stats) and kernel 2 (BN+MLP)."""
    rn8 = _round_up(n, 8)
    np2 = pl.next_power_of_2(rn8)
    budget = int(vmem_cap * 0.5)
    big = vmem_cap >= (100 << 20)                       # v5e/v6e: 128 MiB; v7x: 64 MiB

    def k1_cost(t):   # double-buffered x/y blocks + f32 accumulator spill headroom
        return 2 * t * c * hw * x_isz + 2 * t * hw * y_isz + t * hw * 4

    def k2_cost(t):   # double-buffered y + resident w1t + f32 intermediates + out col
        return (2 * t * hw * y_isz + 2 * w1_bytes + t * hw * 4 + t * hid_pad * 4
                + 2 * t * 128 * 4)

    t1 = min(1024 if big else 256, np2)
    while t1 > 8 and k1_cost(t1) > budget:
        t1 //= 2
    t2 = min(2048 if big else 512, np2)
    while t2 > 8 and k2_cost(t2) > budget:
        t2 //= 2

    if rn8 <= t1 and rn8 <= t2:                         # one tile per kernel, no waste
        return rn8, rn8, rn8
    n_pad = _round_up(n, max(t1, t2))                   # both t1, t2 are powers of two
    return t1, t2, n_pad


def _conv_stats_kernel(x_ref, wconv_ref, y_ref, psum_ref, psq_ref, *, n_channels, hw):
    # x_ref:     (TILE_N1, C*HW) VMEM   native NCHW-flattened layout (no host transpose)
    # wconv_ref: (C,)            SMEM   1x1 conv weight (out_channels = 1)
    # y_ref:     (TILE_N1, HW)   VMEM   conv output (pre-BN)
    # psum_ref:  (1, 8, 128)     VMEM   per-tile sum(y)     (value splat across block)
    # psq_ref:   (1, 8, 128)     VMEM   per-tile sum(y*y)
    #
    # 1x1 conv to one channel: y = sum_c wconv[c] * x[:, c-th HW slice].  Static lane
    # slices + scalar splats from SMEM; no cross-sublane reduction needed.
    y = x_ref[:, 0:hw].astype(jnp.float32) * wconv_ref[0]
    for c in range(1, n_channels):
        y = y + x_ref[:, c * hw:(c + 1) * hw].astype(jnp.float32) * wconv_ref[c]

    y_ref[...] = y.astype(y_ref.dtype)

    # One-pass batch statistics (padded batch rows are zero -> no contribution).
    psum_ref[...] = jnp.broadcast_to(jnp.sum(y), psum_ref.shape)
    psq_ref[...] = jnp.broadcast_to(jnp.sum(y * y), psq_ref.shape)


def _mlp_kernel(y_ref, w1t_ref, b1_ref, w2_ref, scalars_ref, out_ref, *, matmul_dtype):
    # y_ref:       (TILE_N2, HW)
    # w1t_ref:     (HW, HID_pad)   Linear1 weight (transposed, zero-padded)
    # b1_ref:      (1, HID_pad)    Linear1 bias (zero-padded)
    # w2_ref:      (1, HID_pad)    Linear2 weight row (zero-padded)
    # scalars_ref: (3,) SMEM       [bn_scale, bn_shift, b2]
    # out_ref:     (TILE_N2, 1)    tanh value (tiny column store; ~N*4 output bytes)
    y = y_ref[...].astype(jnp.float32)
    y = jnp.maximum(y * scalars_ref[0] + scalars_ref[1], 0.0)   # BN affine + ReLU

    # Linear(HW -> HID_pad) on the MXU (lane-dense, HID_pad % 128 == 0), + bias, ReLU.
    h = jnp.dot(y.astype(matmul_dtype), w1t_ref[...],
                preferred_element_type=jnp.float32)
    h = jnp.maximum(h + b1_ref[...], 0.0)

    # Linear(HID -> 1): VPU multiply + lane reduction (avoid a 1-column MXU matmul).
    o = jnp.sum(h * w2_ref[...], axis=-1, keepdims=True)        # (TILE_N2, 1)
    out_ref[...] = jnp.tanh(o + scalars_ref[2]).astype(out_ref.dtype)


def value_head(x_nchw, params, *, matmul_dtype=jnp.float32):
    """x_nchw: (N, C, H, W) float32/bfloat16.  Returns (N, 1) float32."""
    N, C, H, W = x_nchw.shape
    HW = H * W
    HID = params["w1"].shape[0]
    HID_pad = _round_up(HID, 128)

    vmem_cap = _get_vmem_capacity()
    y_dtype = jnp.dtype(matmul_dtype)
    w1_bytes = HW * HID_pad * y_dtype.itemsize

    t1, t2, n_pad = _pick_tiles(N, C, HW, x_nchw.dtype.itemsize, y_dtype.itemsize,
                                w1_bytes, HID_pad, vmem_cap)
    n_tiles1 = n_pad // t1
    n_tiles2 = n_pad // t2

    # Native layout: (N, C, H, W) -> (N, C*HW) is a free, contiguous reshape.
    x = x_nchw.reshape(N, C * HW)
    if n_pad != N:
        x = jnp.pad(x, ((0, n_pad - N), (0, 0)))        # only when N % tile != 0
    wconv = params["wconv"].reshape(C).astype(jnp.float32)

    x_blk = t1 * C * HW * x.dtype.itemsize
    y_blk1 = t1 * HW * y_dtype.itemsize

    # ---- Kernel 1: 1x1 conv + batch-statistics partial sums (megacore-parallel). ----
    y, psum, psq = pl.pallas_call(
        functools.partial(_conv_stats_kernel, n_channels=C, hw=HW),
        grid=(n_tiles1,),
        in_specs=[
            pl.BlockSpec((t1, C * HW), lambda i: (i, 0)),
            pl.BlockSpec(memory_space=pltpu.MemorySpace.SMEM),
        ],
        out_specs=(
            pl.BlockSpec((t1, HW), lambda i: (i, 0)),
            pl.BlockSpec((1, 8, 128), lambda i: (i, 0, 0)),
            pl.BlockSpec((1, 8, 128), lambda i: (i, 0, 0)),
        ),
        out_shape=(
            jax.ShapeDtypeStruct((n_pad, HW), y_dtype),
            jax.ShapeDtypeStruct((n_tiles1, 8, 128), jnp.float32),
            jax.ShapeDtypeStruct((n_tiles1, 8, 128), jnp.float32),
        ),
        compiler_params=pltpu.CompilerParams(
            dimension_semantics=("parallel",),
            vmem_limit_bytes=_vmem_limit(2 * x_blk + 2 * y_blk1 + t1 * HW * 4, vmem_cap),
        ),
    )(x, wconv)

    # Finish the BatchNorm batch statistics (tiny scalar math between the kernels).
    sum_y = jnp.sum(psum[:, 0, 0])
    sum_y2 = jnp.sum(psq[:, 0, 0])
    count = jnp.float32(N * HW)
    mean = sum_y / count
    var = jnp.maximum(sum_y2 / count - mean * mean, 0.0)
    bn_scale = params["gamma"][0] * jax.lax.rsqrt(var + BN_EPS)
    bn_shift = params["beta"][0] - mean * bn_scale
    scalars = jnp.stack([bn_scale, bn_shift, params["b2"][0]]).astype(jnp.float32)

    # Zero-pad HID to a multiple of 128 (bit-identical results, lane-dense matmul).
    w1t = jnp.pad(params["w1"].T, ((0, 0), (0, HID_pad - HID))).astype(matmul_dtype)
    b1 = jnp.pad(params["b1"], (0, HID_pad - HID)).reshape(1, HID_pad).astype(jnp.float32)
    w2 = jnp.pad(params["w2"], ((0, 0), (0, HID_pad - HID))).astype(jnp.float32)

    y_blk2 = t2 * HW * y_dtype.itemsize
    k2_need = (2 * y_blk2 + 2 * w1_bytes + 2 * t2 * 128 * 4
               + t2 * HW * 4 + t2 * HID_pad * 4)

    # ---- Kernel 2: BN affine + ReLU + Linear + ReLU + Linear + Tanh. ----
    out = pl.pallas_call(
        functools.partial(_mlp_kernel, matmul_dtype=matmul_dtype),
        grid=(n_tiles2,),
        in_specs=[
            pl.BlockSpec((t2, HW), lambda i: (i, 0)),
            pl.BlockSpec((HW, HID_pad), lambda i: (0, 0)),
            pl.BlockSpec((1, HID_pad), lambda i: (0, 0)),
            pl.BlockSpec((1, HID_pad), lambda i: (0, 0)),
            pl.BlockSpec(memory_space=pltpu.MemorySpace.SMEM),
        ],
        out_specs=pl.BlockSpec((t2, 1), lambda i: (i, 0)),
        out_shape=jax.ShapeDtypeStruct((n_pad, 1), jnp.float32),
        compiler_params=pltpu.CompilerParams(
            dimension_semantics=("parallel",),
            vmem_limit_bytes=_vmem_limit(k2_need, vmem_cap),
        ),
    )(y, w1t, b1, w2, scalars)

    return out[:N]


def init_params(key, *, board_size, channels, hidden):
    """Deterministic init mirroring PyTorch default init shapes/scales."""
    hw = board_size * board_size
    k1, k2, k3, k4, k5 = jax.random.split(key, 5)
    bc = 1.0 / math.sqrt(channels)   # conv fan_in = channels * 1 * 1
    b1 = 1.0 / math.sqrt(hw)         # linear1 fan_in
    b2 = 1.0 / math.sqrt(hidden)     # linear2 fan_in
    return {
        "wconv": jax.random.uniform(k1, (1, channels), jnp.float32, -bc, bc),
        "gamma": jnp.ones((1,), jnp.float32),
        "beta": jnp.zeros((1,), jnp.float32),
        "w1": jax.random.uniform(k2, (hidden, hw), jnp.float32, -b1, b1),
        "b1": jax.random.uniform(k3, (hidden,), jnp.float32, -b1, b1),
        "w2": jax.random.uniform(k4, (1, hidden), jnp.float32, -b2, b2),
        "b2": jax.random.uniform(k5, (1,), jnp.float32, -b2, b2),
    }


def value_head_ref(x_nchw, params):
    """Pure-JAX reference for correctness checking."""
    N, C, H, W = x_nchw.shape
    y = jnp.einsum("nchw,oc->nohw", x_nchw, params["wconv"])[:, 0]  # (N, H, W)
    mean = jnp.mean(y)
    var = jnp.mean((y - mean) ** 2)
    y = (y - mean) / jnp.sqrt(var + BN_EPS) * params["gamma"][0] + params["beta"][0]
    y = jnp.maximum(y, 0.0).reshape(N, H * W)
    h = jnp.maximum(jnp.dot(y, params["w1"].T, precision="highest") + params["b1"], 0.0)
    return jnp.tanh(jnp.dot(h, params["w2"].T, precision="highest") + params["b2"])


if __name__ == "__main__":
    board_size, channels, hidden, batch = 16, 4, 32, 2

    key = jax.random.PRNGKey(0)
    kx, kp = jax.random.split(key)
    x = jax.random.normal(kx, (batch, channels, board_size, board_size), jnp.float32)
    params = init_params(kp, board_size=board_size, channels=channels, hidden=hidden)

    ref = value_head_ref(x, params)

    out = jax.block_until_ready(value_head(x, params))
    assert out.shape == (batch, 1)
    # Tolerance covers MXU f32-matmul precision differences vs. the XLA reference.
    assert jnp.allclose(out, ref, atol=5e-3, rtol=1e-3), (out, ref)

    # bf16 matmul path (halves the dominant HBM traffic of y and w1t).
    out_bf16 = jax.block_until_ready(value_head(x, params, matmul_dtype=jnp.bfloat16))
    assert out_bf16.shape == (batch, 1)
    assert jnp.allclose(out_bf16, ref, atol=5e-2), (out_bf16, ref)

    print("KERNEL_OK")
</pallas_src>

<mosaic_0001>
module attributes {stable_mosaic.version = 11 : i64} {
  func.func @_conv_stats_kernel(%arg0: i32, %arg1: memref<8x1024xf32, #tpu.memory_space<vmem>>, %arg2: memref<4xf32, #tpu.memory_space<smem>>, %arg3: memref<8x256xf32, #tpu.memory_space<vmem>>, %arg4: memref<1x8x128xf32, #tpu.memory_space<vmem>>, %arg5: memref<1x8x128xf32, #tpu.memory_space<vmem>>) attributes {dimension_semantics = [#tpu.dimension_semantics<parallel>], iteration_bounds = array<i64: 1>, scalar_prefetch = 0 : i64, scratch_operands = 0 : i64, tpu.core_type = #tpu.core_type<tc>, window_params = [{transform_indices = @transform_0, window_bounds = array<i64: 8, 1024>}, {transform_indices = @transform_1, window_bounds = array<i64: 4>}, {transform_indices = @transform_2, window_bounds = array<i64: 8, 256>}, {transform_indices = @transform_3, window_bounds = array<i64: 1, 8, 128>}, {transform_indices = @transform_4, window_bounds = array<i64: 1, 8, 128>}]} {
    %c0 = arith.constant 0 : index
    %c0_0 = arith.constant 0 : index
    %0 = vector.load %arg1[%c0, %c0_0] : memref<8x1024xf32, #tpu.memory_space<vmem>>, vector<8x256xf32>
    %c0_1 = arith.constant 0 : index
    %1 = memref.load %arg2[%c0_1] : memref<4xf32, #tpu.memory_space<smem>>
    %2 = vector.broadcast %1 : f32 to vector<8x256xf32>
    %3 = arith.mulf %0, %2 : vector<8x256xf32>
    %c0_2 = arith.constant 0 : index
    %c256 = arith.constant 256 : index
    %4 = vector.load %arg1[%c0_2, %c256] : memref<8x1024xf32, #tpu.memory_space<vmem>>, vector<8x256xf32>
    %c1 = arith.constant 1 : index
    %5 = memref.load %arg2[%c1] : memref<4xf32, #tpu.memory_space<smem>>
    %6 = vector.broadcast %5 : f32 to vector<8x256xf32>
    %7 = arith.mulf %4, %6 : vector<8x256xf32>
    %8 = arith.addf %3, %7 : vector<8x256xf32>
    %c0_3 = arith.constant 0 : index
    %c512 = arith.constant 512 : index
    %9 = vector.load %arg1[%c0_3, %c512] : memref<8x1024xf32, #tpu.memory_space<vmem>>, vector<8x256xf32>
    %c2 = arith.constant 2 : index
    %10 = memref.load %arg2[%c2] : memref<4xf32, #tpu.memory_space<smem>>
    %11 = vector.broadcast %10 : f32 to vector<8x256xf32>
    %12 = arith.mulf %9, %11 : vector<8x256xf32>
    %13 = arith.addf %8, %12 : vector<8x256xf32>
    %c0_4 = arith.constant 0 : index
    %c768 = arith.constant 768 : index
    %14 = vector.load %arg1[%c0_4, %c768] : memref<8x1024xf32, #tpu.memory_space<vmem>>, vector<8x256xf32>
    %c3 = arith.constant 3 : index
    %15 = memref.load %arg2[%c3] : memref<4xf32, #tpu.memory_space<smem>>
    %16 = vector.broadcast %15 : f32 to vector<8x256xf32>
    %17 = arith.mulf %14, %16 : vector<8x256xf32>
    %18 = arith.addf %13, %17 : vector<8x256xf32>
    %c0_5 = arith.constant 0 : index
    %c0_6 = arith.constant 0 : index
    %19 = vector.load %arg3[%c0_5, %c0_6] : memref<8x256xf32, #tpu.memory_space<vmem>>, vector<8x256xf32>
    tpu.vector_store %arg3[%c0_5, %c0_6], %18 {strides = array<i32>} : memref<8x256xf32, #tpu.memory_space<vmem>>, vector<8x256xf32>,
    %20 = vector.shape_cast %18 : vector<8x256xf32> to vector<1x8x256xf32>
    %cst = arith.constant dense<0.000000e+00> : vector<1xf32>
    %21 = vector.multi_reduction <add>, %20, %cst [1, 2] : vector<1x8x256xf32> to vector<1xf32>
    %22 = vector.shape_cast %21 : vector<1xf32> to vector<1x1x1xf32>
    %23 = vector.extract %22[0, 0, 0] : f32 from vector<1x1x1xf32>
    %24 = vector.broadcast %23 : f32 to vector<1x8x128xf32>
    %c0_7 = arith.constant 0 : index
    %c0_8 = arith.constant 0 : index
    %c0_9 = arith.constant 0 : index
    %25 = vector.load %arg4[%c0_7, %c0_8, %c0_9] : memref<1x8x128xf32, #tpu.memory_space<vmem>>, vector<1x8x128xf32>
    tpu.vector_store %arg4[%c0_7, %c0_8, %c0_9], %24 {strides = array<i32>} : memref<1x8x128xf32, #tpu.memory_space<vmem>>, vector<1x8x128xf32>,
    %26 = arith.mulf %18, %18 : vector<8x256xf32>
    %27 = vector.shape_cast %26 : vector<8x256xf32> to vector<1x8x256xf32>
    %cst_10 = arith.constant dense<0.000000e+00> : vector<1xf32>
    %28 = vector.multi_reduction <add>, %27, %cst_10 [1, 2] : vector<1x8x256xf32> to vector<1xf32>
    %29 = vector.shape_cast %28 : vector<1xf32> to vector<1x1x1xf32>
    %30 = vector.extract %29[0, 0, 0] : f32 from vector<1x1x1xf32>
    %31 = vector.broadcast %30 : f32 to vector<1x8x128xf32>
    %c0_11 = arith.constant 0 : index
    %c0_12 = arith.constant 0 : index
    %c0_13 = arith.constant 0 : index
    %32 = vector.load %arg5[%c0_11, %c0_12, %c0_13] : memref<1x8x128xf32, #tpu.memory_space<vmem>>, vector<1x8x128xf32>
    tpu.vector_store %arg5[%c0_11, %c0_12, %c0_13], %31 {strides = array<i32>} : memref<1x8x128xf32, #tpu.memory_space<vmem>>, vector<1x8x128xf32>,
    return
  }
  func.func @transform_0(%arg0: i32) -> (i32, i32) {
    %c0_i32 = arith.constant 0 : i32
    %c0_i32_0 = arith.constant 0 : i32
    return %arg0, %c0_i32 : i32, i32
  }
  func.func @transform_1(%arg0: i32) -> i32 {
    %c0_i32 = arith.constant 0 : i32
    %c0_i32_0 = arith.constant 0 : i32
    return %c0_i32 : i32
  }
  func.func @transform_2(%arg0: i32) -> (i32, i32) {
    %c0_i32 = arith.constant 0 : i32
    %c0_i32_0 = arith.constant 0 : i32
    return %arg0, %c0_i32 : i32, i32
  }
  func.func @transform_3(%arg0: i32) -> (i32, i32, i32) {
    %c0_i32 = arith.constant 0 : i32
    %c0_i32_0 = arith.constant 0 : i32
    %c0_i32_1 = arith.constant 0 : i32
    return %arg0, %c0_i32, %c0_i32_0 : i32, i32, i32
  }
  func.func @transform_4(%arg0: i32) -> (i32, i32, i32) {
    %c0_i32 = arith.constant 0 : i32
    %c0_i32_0 = arith.constant 0 : i32
    %c0_i32_1 = arith.constant 0 : i32
    return %arg0, %c0_i32, %c0_i32_0 : i32, i32, i32
  }
}

</mosaic_0001>

<llo_original>
// kernel: tpu_custom_call.1
$region0: #{tpu_custom_call.1}
  #allocation0 [shape = 'u32[]', space=smem, size = 0x4, offset = 0x4, fixed_abs, tag = 'smem constant byte address 0x4 - core index']
  #allocation1 [shape = 'u32[144,128]{1,0:T(1,128)}', space=vmem, size = 0x12000, scoped, tag = 'internal scratch']
  %s0 = inlined_call_operand.hbm [shape: f32[8,1024], index: 0, kind: input, shape index: {}]
  %s1 = inlined_call_operand.vmem [shape: f32[4], index: 1, kind: input, shape index: {}]
  %s2 = inlined_call_operand.hbm [shape: f32[8,256], index: 2, kind: output, shape index: {0}]
  %s3 = inlined_call_operand.hbm [shape: f32[1,8,128], index: 3, kind: output, shape index: {1}]
  %s4 = inlined_call_operand.hbm [shape: f32[1,8,128], index: 4, kind: output, shape index: {2}]
  %5 = xla_tuple %s2, %s3, %s4
  %s6 = sld [smem:[#allocation0]]
  $region42: #{tpu_custom_call.1} parent=0
    _
  %s8 = ssub.s32 1, %s6
  %s9 = scalar_select 0, %s8, %s6
  $region1: #{tpu_custom_call.1} parent=0
    #allocation2 [shape = 'u8[32768]{0}', space=vmem, size = 0x8000, scoped, tag = 'input window, operand 0, single buffered']
    #allocation3 [shape = 's32[1]{0}', space=sflag, size = 0x4, scoped, tag = 'scoped memory for tpu_custom_call.1']
    #allocation4 [shape = 's32[1]{0}', space=sflag, size = 0x4, scoped, tag = 'scoped memory for tpu_custom_call.1']
    #allocation5 [shape = 's32[1]{0}', space=sflag, size = 0x4, scoped, tag = 'scoped memory for tpu_custom_call.1']
    #allocation6 [shape = 'u8[512]{0}', space=smem, size = 0x200, scoped, tag = 'input window, operand 1, single buffered']
    #allocation7 [shape = 'u8[8192]{0}', space=vmem, size = 0x2000, scoped, tag = 'output window, operand 0, single buffered']
    #allocation8 [shape = 'u8[4096]{0}', space=vmem, size = 0x1000, scoped, tag = 'output window, operand 1, single buffered']
    #allocation9 [shape = 's32[1]{0}', space=sflag, size = 0x4, scoped, tag = 'scoped memory for tpu_custom_call.1']
    #allocation10 [shape = 'u8[4096]{0}', space=vmem, size = 0x1000, scoped, tag = 'output window, operand 2, single buffered']
    %10 = vsyncpa [#allocation3], 0
    %11 = vsyncpa [#allocation5], 0
    %12 = vsyncpa [#allocation4], 0
    %13 = vsyncpa [#allocation9], 0
    // Predicated region
    $region2: #{tpu_custom_call.1} parent=1 // pred_check
      _
    $region3: #{tpu_custom_call.1} parent=1 // pred_check_branch
      %15 = sbr.rel (0) target = $region5
    $region4: #{tpu_custom_call.1} parent=1 // pred_region
      %s17 = ssub.s32 1024, 1024
      %18 = vsyncadd [#allocation3], %s17
      %s20 = sshll.u32 [#allocation2], 4
      %s21 = int_to_ptr.vmem [resolvable:$true] %s20
      %23 = dma.hbm_to_vmem [thread:$0]  %s0, 1024, %s21, [#allocation3]
    $region5: #{tpu_custom_call.1} parent=1 // pred_fallthru
      _
    // Predicated region
    $region6: #{tpu_custom_call.1} parent=1 // pred_check
      _
    $region7: #{tpu_custom_call.1} parent=1 // pred_check_branch
      %25 = sbr.rel (0) target = $region9
    $region8: #{tpu_custom_call.1} parent=1 // pred_region
      %s27 = ssub.s32 16, 16
      %28 = vsyncadd [#allocation5], %s27
      %s30 = sshll.u32 %s1, 4
      %s31 = int_to_ptr.vmem [resolvable:$true] %s30
      %33 = dma.vmem_to_smem %s31, 16, [#allocation6], [#allocation5]
    $region9: #{tpu_custom_call.1} parent=1 // pred_fallthru
      _
    // Predicated region
    $region10: #{tpu_custom_call.1} parent=1 // pred_check
      _
    $region11: #{tpu_custom_call.1} parent=1 // pred_check_branch
      %35 = sbr.rel (0) target = $region13
    $region12: #{tpu_custom_call.1} parent=1 // pred_region
      %36 = dma.done [#allocation3], 1024
    $region13: #{tpu_custom_call.1} parent=1 // pred_fallthru
      _
    // Predicated region
    $region14: #{tpu_custom_call.1} parent=1 // pred_check
      _
    $region15: #{tpu_custom_call.1} parent=1 // pred_check_branch
      %38 = sbr.rel (0) target = $region17
    $region16: #{tpu_custom_call.1} parent=1 // pred_region
      %39 = dma.done [#allocation5], 16
    $region17: #{tpu_custom_call.1} parent=1 // pred_fallthru
      _
    %40 = sfence
    %v41 = vld [vmem:[#allocation2] sm:$0xff]
    %v42 = vld [vmem:[#allocation2 + $0x8] sm:$0xff]
    %s43 = sld [smem:[#allocation6]]
    %v44 = vstv %s43
    %v45 = vmul.f32 %v41, %v44
    %v46 = vmul.f32 %v42, %v44
    %v47 = vld [vmem:[#allocation2 + $0x10] sm:$0xff]
    %v48 = vld [vmem:[#allocation2 + $0x18] sm:$0xff]
    %s49 = sld [smem:[#allocation6 + $0x1]]
    %v50 = vstv %s49
    %v51 = vmul.f32 %v47, %v50
    %v52 = vmul.f32 %v48, %v50
    %v53 = vadd.f32 %v45, %v51
    %v54 = vadd.f32 %v46, %v52
    %v55 = vld [vmem:[#allocation2 + $0x20] sm:$0xff]
    %v56 = vld [vmem:[#allocation2 + $0x28] sm:$0xff]
    %s57 = sld [smem:[#allocation6 + $0x2]]
    %v58 = vstv %s57
    %v59 = vmul.f32 %v55, %v58
    %v60 = vmul.f32 %v56, %v58
    %v61 = vadd.f32 %v53, %v59
    %v62 = vadd.f32 %v54, %v60
    %v63 = vld [vmem:[#allocation2 + $0x30] sm:$0xff]
    %v64 = vld [vmem:[#allocation2 + $0x38] sm:$0xff]
    %s65 = sld [smem:[#allocation6 + $0x3]]
    %v66 = vstv %s65
    %v67 = vmul.f32 %v63, %v66
    %v68 = vmul.f32 %v64, %v66
    %v69 = vadd.f32 %v61, %v67
    %v70 = vadd.f32 %v62, %v68
    %71 = vst [vmem:[#allocation7] sm:$0xff] %v69
    %72 = vst [vmem:[#allocation7 + $0x8] sm:$0xff] %v70
    %v73 = vadd.f32 %v69, %v70
    %74 = vadd.xlane.f32.xlu0 %v73
    %v75 = vpop.xlane.xlu0 %74
    %v76 = vrot.slane %v75, 4
    %v77 = vadd.f32 %v75, %v76
    %v78 = vrot.slane %v77, 2
    %v79 = vadd.f32 %v77, %v78
    %v80 = vrot.slane %v79, 1
    %v81 = vadd.f32 %v79, %v80
    %s82 = vtos %v81
    %v83 = vstv %s82
    %84 = vst [vmem:[#allocation8] sm:$0xff] %v83
    %v85 = vmul.f32 %v69, %v69
    %v86 = vmul.f32 %v70, %v70
    %v87 = vadd.f32 %v85, %v86
    %88 = vadd.xlane.f32.xlu0 %v87
    %v89 = vpop.xlane.xlu0 %88
    %v90 = vrot.slane %v89, 4
    %v91 = vadd.f32 %v89, %v90
    %v92 = vrot.slane %v91, 2
    %v93 = vadd.f32 %v91, %v92
    %v94 = vrot.slane %v93, 1
    %v95 = vadd.f32 %v93, %v94
    %s96 = vtos %v95
    %v97 = vstv %s96
    %98 = vst [vmem:[#allocation10] sm:$0xff] %v97
    // Predicated region
    $region18: #{tpu_custom_call.1} parent=1 // pred_check
      _
    $region19: #{tpu_custom_call.1} parent=1 // pred_check_branch
      %100 = sbr.rel (0) target = $region21
    $region20: #{tpu_custom_call.1} parent=1 // pred_region
      %s102 = ssub.s32 256, 256
      %103 = vsyncadd [#allocation4], %s102
      %s105 = sshll.u32 [#allocation7], 4
      %s106 = int_to_ptr.vmem [resolvable:$true] %s105
      %108 = dma.vmem_to_hbm [thread:$0]  %s106, 256, %s2, [#allocation4]
    $region21: #{tpu_custom_call.1} parent=1 // pred_fallthru
      _
    // Predicated region
    $region22: #{tpu_custom_call.1} parent=1 // pred_check
      _
    $region23: #{tpu_custom_call.1} parent=1 // pred_check_branch
      %110 = sbr.rel (0) target = $region25
    $region24: #{tpu_custom_call.1} parent=1 // pred_region
      %s112 = ssub.s32 128, 128
      %113 = vsyncadd [#allocation9], %s112
      %s115 = sshll.u32 [#allocation8], 4
      %s116 = int_to_ptr.vmem [resolvable:$true] %s115
      %118 = dma.vmem_to_hbm [thread:$0]  %s116, 128, %s3, [#allocation9]
    $region25: #{tpu_custom_call.1} parent=1 // pred_fallthru
      _
    // Predicated region
    $region26: #{tpu_custom_call.1} parent=1 // pred_check
      _
    $region27: #{tpu_custom_call.1} parent=1 // pred_check_branch
      %120 = sbr.rel (0) target = $region29
    $region28: #{tpu_custom_call.1} parent=1 // pred_region
      %s122 = ssub.s32 128, 128
      %123 = vsyncadd [#allocation9], %s122
      %s125 = sshll.u32 [#allocation10], 4
      %s126 = int_to_ptr.vmem [resolvable:$true] %s125
      %128 = dma.vmem_to_hbm [thread:$0]  %s126, 128, %s4, [#allocation9]
    $region29: #{tpu_custom_call.1} parent=1 // pred_fallthru
      _
    // Predicated region
    $region30: #{tpu_custom_call.1} parent=1 // pred_check
      _
    $region31: #{tpu_custom_call.1} parent=1 // pred_check_branch
      %130 = sbr.rel (0) target = $region33
    $region32: #{tpu_custom_call.1} parent=1 // pred_region
      %131 = dma.done [#allocation4], 256
    $region33: #{tpu_custom_call.1} parent=1 // pred_fallthru
      _
    // Predicated region
    $region34: #{tpu_custom_call.1} parent=1 // pred_check
      _
    $region35: #{tpu_custom_call.1} parent=1 // pred_check_branch
      %133 = sbr.rel (0) target = $region37
    $region36: #{tpu_custom_call.1} parent=1 // pred_region
      %134 = dma.done [#allocation9], 128
    $region37: #{tpu_custom_call.1} parent=1 // pred_fallthru
      _
    // Predicated region
    $region38: #{tpu_custom_call.1} parent=1 // pred_check
      _
    $region39: #{tpu_custom_call.1} parent=1 // pred_check_branch
      %136 = sbr.rel (0) target = $region41
    $region40: #{tpu_custom_call.1} parent=1 // pred_region
      %137 = dma.done [#allocation9], 128
    $region41: #{tpu_custom_call.1} parent=1 // pred_fallthru
      _
    %138 = vsyncpa [#allocation3], 1
    %139 = vsyncpa [#allocation4], 1
    %140 = vsyncpa [#allocation9], 1
    %141 = vsyncpa [#allocation5], 1

</llo_original>
